<compile_context>
chip_gen: v6e
topology: v6e:2x2x1
jax: 0.10.0
libtpu: 0.0.40
codegen_flags: <defaults>
</compile_context>

<pallas_src>
import functools

import numpy as np
import jax
import jax.numpy as jnp
from jax import lax
from jax.experimental import pallas as pl
from jax.experimental.pallas import tpu as pltpu

# SELU constants (match torch.nn.SELU)
_SELU_SCALE = 1.0507009873554804934193349852946
_SELU_ALPHA = 1.6732632423543772848170429916717
_SELU_SCALE_ALPHA = _SELU_SCALE * _SELU_ALPHA

_LANE = 128                         # pad feature dims to a multiple of this
_SUBLANE = 8                        # pad batch to a multiple of this
_TM_HARD_CAP = 1024                 # never exceed this many batch rows per tile
_VMEM_BUDGET = 28 * 1024 * 1024     # tile-sizing budget (vs 32 MiB scoped limit)
_VMEM_LIMIT = 32 << 20              # scoped-VMEM limit handed to Mosaic
_FUSED_STACK_BYTES = 2 << 20        # weight stacks up to this stay VMEM-resident


def _round_up(x: int, m: int) -> int:
    return ((x + m - 1) // m) * m


# --------------------------------------------------------------------------
# Kernels
# --------------------------------------------------------------------------
def _dsnn_fused_kernel(x_ref, w_ref, b_ref, o_ref, act_ref):
    """All layers in one grid step (whole weight stack VMEM-resident).

    grid = (batch_tiles,).  act_ref is a bf16 VMEM scratch carrying the
    running activation.  The SELU scale is folded into layers 1..L's weights
    at pack time, so the epilogue is the unscaled SELU branch.
    """
    n_layers = w_ref.shape[0]
    act_ref[...] = x_ref[...].astype(jnp.bfloat16)

    def hidden_layer(l, carry):
        y = jnp.dot(act_ref[...], w_ref[l], preferred_element_type=jnp.float32)
        y = y + b_ref[l]
        # expm1 approximated as exp(min(y,0)) - 1: overflow-safe; absolute
        # error ~1 ulp of 1.0 (relative error for tiny |y| is larger but far
        # below the bf16 matmul noise floor).
        neg = _SELU_ALPHA * (jnp.exp(jnp.minimum(y, 0.0)) - 1.0)
        act_ref[...] = jnp.where(y > 0.0, y, neg).astype(jnp.bfloat16)
        return carry

    lax.fori_loop(0, n_layers - 1, hidden_layer, 0, unroll=True)

    # Output layer: no activation; write only the lane-dense output slab.
    y = jnp.dot(act_ref[...], w_ref[n_layers - 1],
                preferred_element_type=jnp.float32)
    y = y + b_ref[n_layers - 1]
    o_ref[...] = y[:, :o_ref.shape[1]].astype(o_ref.dtype)


def _dsnn_streamed_kernel(x_ref, w_ref, b_ref, o_ref, act_ref):
    """One grid step = one layer applied to one batch tile.

    grid = (batch_tiles, n_layers).  Per-layer bf16 weights stream through a
    double-buffered (1, P, P) block; the bias stack is VMEM-resident; the
    running activation lives in a bf16 VMEM scratch; only the last layer
    writes the (narrow, lane-dense) output block.
    """
    layer = pl.program_id(1)
    n_layers = pl.num_programs(1)

    @pl.when(layer == 0)
    def _():
        act_ref[...] = x_ref[...].astype(jnp.bfloat16)

    y = jnp.dot(act_ref[...], w_ref[0], preferred_element_type=jnp.float32)
    y = y + b_ref[layer]

    @pl.when(layer < n_layers - 1)
    def _():
        neg = _SELU_ALPHA * (jnp.exp(jnp.minimum(y, 0.0)) - 1.0)
        act_ref[...] = jnp.where(y > 0.0, y, neg).astype(jnp.bfloat16)

    @pl.when(layer == n_layers - 1)
    def _():
        o_ref[...] = y[:, :o_ref.shape[1]].astype(o_ref.dtype)


# --------------------------------------------------------------------------
# Parameters
# --------------------------------------------------------------------------
def init_dsnn_params(key, n_input_features, n_hidden_layers, n_hidden_units,
                     n_output_features):
    """Mirror the PyTorch module: weights ~ N(0, 1/sqrt(fan_in)); biases keep
    nn.Linear's default U(-1/sqrt(fan_in), 1/sqrt(fan_in)).  Weights stored
    transposed vs PyTorch: (in_features, out_features)."""
    hidden = []
    fan_in = n_input_features
    for _ in range(n_hidden_layers):
        key, wk, bk = jax.random.split(key, 3)
        w = (jax.random.normal(wk, (fan_in, n_hidden_units), dtype=jnp.float32)
             / jnp.sqrt(jnp.float32(fan_in)))
        bound = 1.0 / np.sqrt(fan_in)
        b = jax.random.uniform(bk, (1, n_hidden_units), dtype=jnp.float32,
                               minval=-bound, maxval=bound)
        hidden.append((w, b))
        fan_in = n_hidden_units
    key, wk, bk = jax.random.split(key, 3)
    w_out = (jax.random.normal(wk, (fan_in, n_output_features), dtype=jnp.float32)
             / jnp.sqrt(jnp.float32(fan_in)))
    bound = 1.0 / np.sqrt(fan_in)
    b_out = jax.random.uniform(bk, (1, n_output_features), dtype=jnp.float32,
                               minval=-bound, maxval=bound)
    return hidden, (w_out, b_out)


def pack_dsnn_params(hidden_params, output_params):
    """Stack all layers into padded arrays for the fused kernels.

    Returns (w_stack bf16 (L+1, P, P), b_stack f32 (L+1, 1, P), n_out).
    The SELU scale of layer l's activation is folded into layer l+1's weight
    (W @ (scale*a) == (scale*W) @ a), so the kernel epilogue omits the scale.
    Zero padding keeps padded lanes exactly zero through every layer.
    """
    layers = list(hidden_params) + [output_params]
    max_dim = max(max(w.shape[0], w.shape[1]) for w, _ in layers)
    p = _round_up(max_dim, _LANE)
    n_layers = len(layers)
    w_stack = jnp.zeros((n_layers, p, p), jnp.bfloat16)
    b_stack = jnp.zeros((n_layers, 1, p), jnp.float32)
    for i, (w, b) in enumerate(layers):
        w_f32 = w.astype(jnp.float32)
        if i > 0:
            w_f32 = w_f32 * _SELU_SCALE   # fold previous layer's SELU scale
        w_stack = w_stack.at[i, :w.shape[0], :w.shape[1]].set(
            w_f32.astype(jnp.bfloat16))
        b_stack = b_stack.at[i, :, :b.shape[1]].set(b.astype(jnp.float32))
    return w_stack, b_stack, output_params[0].shape[1]


# --------------------------------------------------------------------------
# Tiling helpers
# --------------------------------------------------------------------------
def _choose_tm(p, p_out, fixed_bytes):
    """Largest batch tile (rows) whose VMEM footprint fits the budget.
    Per-tile bytes: double-buffered f32 x tile + double-buffered f32 out tile
    + bf16 activation scratch."""
    for tm in (1024, 512, 256, 128, 64, 32, 16, 8):
        per_tile = 2 * tm * p * 4 + 2 * tm * p_out * 4 + tm * p * 2
        if fixed_bytes + per_tile <= _VMEM_BUDGET:
            return tm
    return 8


def _choose_batch_tiling(n, tm_cap):
    """Pad/tile the batch: sublane aligned, and >=2 tiles whenever there is
    enough work so the 'parallel' batch axis can feed both v7x TensorCores."""
    n_pad = _round_up(max(n, 1), _SUBLANE)
    if n_pad <= tm_cap:
        num_tiles = 2 if n_pad >= 2 * _SUBLANE else 1
    else:
        num_tiles = -(-n_pad // tm_cap)          # ceil div
    tm = _round_up(-(-n_pad // num_tiles), _SUBLANE)
    return num_tiles * tm, tm


# --------------------------------------------------------------------------
# Forward pass
# --------------------------------------------------------------------------
@functools.partial(jax.jit, static_argnums=(3, 4))
def dsnn_forward(x, w_stack, b_stack, n_output_features, force_streamed=False):
    """Fused DSNN forward.  Accepts (n_samples, n_in) or (n_in,), returns the
    matching rank, like the PyTorch module."""
    squeeze = (x.ndim == 1)
    if squeeze:
        x = x[None, :]
    n, n_in = x.shape
    n_layers, p, _ = w_stack.shape
    p_out = _round_up(n_output_features, _LANE)

    stack_bytes = w_stack.size * w_stack.dtype.itemsize
    bias_bytes = b_stack.size * b_stack.dtype.itemsize
    use_fused = (not force_streamed) and (stack_bytes <= _FUSED_STACK_BYTES)

    if use_fused:
        # Whole stack resident; budget 2 copies to stay conservative.
        fixed = 2 * stack_bytes + 2 * bias_bytes
    else:
        # Double-buffered per-layer weight block + resident bias stack.
        fixed = 2 * p * p * 2 + bias_bytes
    tm_cap = min(_TM_HARD_CAP, _choose_tm(p, p_out, fixed))
    n_pad, tm = _choose_batch_tiling(n, tm_cap)

    x_p = jnp.zeros((n_pad, p), jnp.float32).at[:n, :n_in].set(
        x.astype(jnp.float32))

    if use_fused:
        out_padded = pl.pallas_call(
            _dsnn_fused_kernel,
            out_shape=jax.ShapeDtypeStruct((n_pad, p_out), jnp.float32),
            grid_spec=pltpu.PrefetchScalarGridSpec(
                num_scalar_prefetch=0,
                grid=(n_pad // tm,),
                in_specs=[
                    pl.BlockSpec((tm, p), lambda i: (i, 0)),             # x tile
                    pl.BlockSpec((n_layers, p, p), lambda i: (0, 0, 0)), # weights
                    pl.BlockSpec((n_layers, 1, p), lambda i: (0, 0, 0)), # biases
                ],
                out_specs=pl.BlockSpec((tm, p_out), lambda i: (i, 0)),
                scratch_shapes=[pltpu.VMEM((tm, p), jnp.bfloat16)],      # act
            ),
            compiler_params=pltpu.CompilerParams(
                dimension_semantics=("parallel",),
                vmem_limit_bytes=_VMEM_LIMIT),
        )(x_p, w_stack, b_stack)
    else:
        out_padded = pl.pallas_call(
            _dsnn_streamed_kernel,
            out_shape=jax.ShapeDtypeStruct((n_pad, p_out), jnp.float32),
            grid_spec=pltpu.PrefetchScalarGridSpec(
                num_scalar_prefetch=0,
                grid=(n_pad // tm, n_layers),
                in_specs=[
                    pl.BlockSpec((tm, p), lambda i, l: (i, 0)),             # x tile
                    pl.BlockSpec((1, p, p), lambda i, l: (l, 0, 0)),        # layer w
                    pl.BlockSpec((n_layers, 1, p), lambda i, l: (0, 0, 0)), # biases
                ],
                out_specs=pl.BlockSpec((tm, p_out), lambda i, l: (i, 0)),
                scratch_shapes=[pltpu.VMEM((tm, p), jnp.bfloat16)],         # act
            ),
            compiler_params=pltpu.CompilerParams(
                dimension_semantics=("parallel", "arbitrary"),
                vmem_limit_bytes=_VMEM_LIMIT),
        )(x_p, w_stack, b_stack)

    out = out_padded[:n, :n_output_features]
    if squeeze:
        out = out[0]
    return out


# --------------------------------------------------------------------------
# Pure-JAX reference (module math; bf16 matmul operands like the kernel)
# --------------------------------------------------------------------------
def _reference_forward(x, hidden_params, output_params):
    h = x.astype(jnp.float32)
    if h.ndim == 1:
        h = h[None, :]
    for w, b in hidden_params:
        y = jnp.dot(h.astype(jnp.bfloat16), w.astype(jnp.bfloat16),
                    preferred_element_type=jnp.float32) + b
        h = jnp.where(y > 0, _SELU_SCALE * y, _SELU_SCALE_ALPHA * jnp.expm1(y))
    w, b = output_params
    out = jnp.dot(h.astype(jnp.bfloat16), w.astype(jnp.bfloat16),
                  preferred_element_type=jnp.float32) + b
    if x.ndim == 1:
        out = out[0]
    return out


if __name__ == "__main__":
    # Small shapes consistent with the module's forward contract.
    n_samples = 8
    n_input_features = 32
    n_hidden_layers = 2
    n_hidden_units = 64
    n_output_features = 16

    key = jax.random.PRNGKey(0)
    key, xk = jax.random.split(key)
    x = jax.random.normal(xk, (n_samples, n_input_features), dtype=jnp.float32)

    hidden_params, output_params = init_dsnn_params(
        key, n_input_features, n_hidden_layers, n_hidden_units,
        n_output_features)
    w_stack, b_stack, n_out = pack_dsnn_params(hidden_params, output_params)

    ref = np.asarray(_reference_forward(x, hidden_params, output_params))

    # Fused (VMEM-resident weight stack) path.
    out = jax.block_until_ready(dsnn_forward(x, w_stack, b_stack, n_out))
    assert out.shape == (n_samples, n_output_features)
    np.testing.assert_allclose(np.asarray(out), ref, rtol=2e-2, atol=2e-2)

    # Streamed (per-layer weight pipeline) path exercised at the same shapes.
    out_s = jax.block_until_ready(
        dsnn_forward(x, w_stack, b_stack, n_out, True))
    assert out_s.shape == (n_samples, n_output_features)
    np.testing.assert_allclose(np.asarray(out_s), ref, rtol=2e-2, atol=2e-2)

    # 1-D input path (single sample), like the PyTorch module supports.
    out1d = jax.block_until_ready(dsnn_forward(x[0], w_stack, b_stack, n_out))
    assert out1d.shape == (n_output_features,)
    np.testing.assert_allclose(np.asarray(out1d), ref[0], rtol=2e-2, atol=2e-2)

    print("KERNEL_OK")
</pallas_src>

<mosaic_0001>
module attributes {stable_mosaic.version = 11 : i64} {
  func.func @_dsnn_fused_kernel(%arg0: i32, %arg1: memref<8x128xf32, #tpu.memory_space<vmem>>, %arg2: memref<3x128x128xbf16, #tpu.memory_space<vmem>>, %arg3: memref<3x1x128xf32, #tpu.memory_space<vmem>>, %arg4: memref<8x128xf32, #tpu.memory_space<vmem>>, %arg5: memref<8x128xbf16, #tpu.memory_space<vmem>>) attributes {dimension_semantics = [#tpu.dimension_semantics<parallel>], iteration_bounds = array<i64: 1>, scalar_prefetch = 0 : i64, scratch_operands = 1 : i64, tpu.core_type = #tpu.core_type<tc>, window_params = [{transform_indices = @transform_0, window_bounds = array<i64: 8, 128>}, {pipeline_mode = #tpu.pipeline_mode<synchronous>, transform_indices = @transform_1, window_bounds = array<i64: 3, 128, 128>}, {pipeline_mode = #tpu.pipeline_mode<synchronous>, transform_indices = @transform_2, window_bounds = array<i64: 3, 1, 128>}, {transform_indices = @transform_3, window_bounds = array<i64: 8, 128>}]} {
    %c0 = arith.constant 0 : index
    %c0_0 = arith.constant 0 : index
    %0 = vector.load %arg1[%c0, %c0_0] : memref<8x128xf32, #tpu.memory_space<vmem>>, vector<8x128xf32>
    %1 = arith.truncf %0 : vector<8x128xf32> to vector<8x128xbf16>
    %c0_1 = arith.constant 0 : index
    %c0_2 = arith.constant 0 : index
    %2 = vector.load %arg5[%c0_1, %c0_2] : memref<8x128xbf16, #tpu.memory_space<vmem>>, vector<8x128xbf16>
    tpu.vector_store %arg5[%c0_1, %c0_2], %1 {strides = array<i32>} : memref<8x128xbf16, #tpu.memory_space<vmem>>, vector<8x128xbf16>,
    %c0_i32 = arith.constant 0 : i32
    %c0_3 = arith.constant 0 : index
    %c0_4 = arith.constant 0 : index
    %3 = vector.load %arg5[%c0_3, %c0_4] : memref<8x128xbf16, #tpu.memory_space<vmem>>, vector<8x128xbf16>
    %4 = arith.index_cast %c0_i32 : i32 to index
    %c0_5 = arith.constant 0 : index
    %c0_6 = arith.constant 0 : index
    %5 = vector.load %arg2[%4, %c0_5, %c0_6] : memref<3x128x128xbf16, #tpu.memory_space<vmem>>, vector<1x128x128xbf16>
    %6 = vector.shape_cast %5 : vector<1x128x128xbf16> to vector<128x128xbf16>
    %cst = arith.constant dense<0.000000e+00> : vector<8x128xf32>
    %7 = tpu.matmul %3, %6, %cst {dimension_numbers = #tpu.dot_dimension_numbers<[1], [0], [0], [1], [0, 0, 1, 1], [], []>} : vector<8x128xbf16>, vector<128x128xbf16>, vector<8x128xf32> -> vector<8x128xf32>
    %8 = arith.index_cast %c0_i32 : i32 to index
    %c0_7 = arith.constant 0 : index
    %c0_8 = arith.constant 0 : index
    %9 = vector.load %arg3[%8, %c0_7, %c0_8] : memref<3x1x128xf32, #tpu.memory_space<vmem>>, vector<1x1x128xf32>
    %10 = vector.shape_cast %9 : vector<1x1x128xf32> to vector<1x128xf32>
    %11 = vector.broadcast %10 : vector<1x128xf32> to vector<8x128xf32>
    %12 = arith.addf %7, %11 : vector<8x128xf32>
    %cst_9 = arith.constant 0.000000e+00 : f32
    %13 = vector.broadcast %cst_9 : f32 to vector<8x128xf32>
    %14 = arith.minimumf %12, %13 : vector<8x128xf32>
    %15 = math.exp %14 : vector<8x128xf32>
    %cst_10 = arith.constant 1.000000e+00 : f32
    %16 = vector.broadcast %cst_10 : f32 to vector<8x128xf32>
    %17 = arith.subf %15, %16 : vector<8x128xf32>
    %cst_11 = arith.constant 1.67326319 : f32
    %18 = vector.broadcast %cst_11 : f32 to vector<8x128xf32>
    %19 = arith.mulf %18, %17 : vector<8x128xf32>
    %cst_12 = arith.constant 0.000000e+00 : f32
    %20 = vector.broadcast %cst_12 : f32 to vector<8x128xf32>
    %21 = arith.cmpf ogt, %12, %20 : vector<8x128xf32>
    %22 = arith.select %21, %12, %19 : vector<8x128xi1>, vector<8x128xf32>
    %23 = arith.truncf %22 : vector<8x128xf32> to vector<8x128xbf16>
    %c0_13 = arith.constant 0 : index
    %c0_14 = arith.constant 0 : index
    %24 = vector.load %arg5[%c0_13, %c0_14] : memref<8x128xbf16, #tpu.memory_space<vmem>>, vector<8x128xbf16>
    tpu.vector_store %arg5[%c0_13, %c0_14], %23 {strides = array<i32>} : memref<8x128xbf16, #tpu.memory_space<vmem>>, vector<8x128xbf16>,
    %c1_i32 = arith.constant 1 : i32
    %c0_15 = arith.constant 0 : index
    %c0_16 = arith.constant 0 : index
    %25 = vector.load %arg5[%c0_15, %c0_16] : memref<8x128xbf16, #tpu.memory_space<vmem>>, vector<8x128xbf16>
    %26 = arith.index_cast %c1_i32 : i32 to index
    %c0_17 = arith.constant 0 : index
    %c0_18 = arith.constant 0 : index
    %27 = vector.load %arg2[%26, %c0_17, %c0_18] : memref<3x128x128xbf16, #tpu.memory_space<vmem>>, vector<1x128x128xbf16>
    %28 = vector.shape_cast %27 : vector<1x128x128xbf16> to vector<128x128xbf16>
    %cst_19 = arith.constant dense<0.000000e+00> : vector<8x128xf32>
    %29 = tpu.matmul %25, %28, %cst_19 {dimension_numbers = #tpu.dot_dimension_numbers<[1], [0], [0], [1], [0, 0, 1, 1], [], []>} : vector<8x128xbf16>, vector<128x128xbf16>, vector<8x128xf32> -> vector<8x128xf32>
    %30 = arith.index_cast %c1_i32 : i32 to index
    %c0_20 = arith.constant 0 : index
    %c0_21 = arith.constant 0 : index
    %31 = vector.load %arg3[%30, %c0_20, %c0_21] : memref<3x1x128xf32, #tpu.memory_space<vmem>>, vector<1x1x128xf32>
    %32 = vector.shape_cast %31 : vector<1x1x128xf32> to vector<1x128xf32>
    %33 = vector.broadcast %32 : vector<1x128xf32> to vector<8x128xf32>
    %34 = arith.addf %29, %33 : vector<8x128xf32>
    %cst_22 = arith.constant 0.000000e+00 : f32
    %35 = vector.broadcast %cst_22 : f32 to vector<8x128xf32>
    %36 = arith.minimumf %34, %35 : vector<8x128xf32>
    %37 = math.exp %36 : vector<8x128xf32>
    %cst_23 = arith.constant 1.000000e+00 : f32
    %38 = vector.broadcast %cst_23 : f32 to vector<8x128xf32>
    %39 = arith.subf %37, %38 : vector<8x128xf32>
    %cst_24 = arith.constant 1.67326319 : f32
    %40 = vector.broadcast %cst_24 : f32 to vector<8x128xf32>
    %41 = arith.mulf %40, %39 : vector<8x128xf32>
    %cst_25 = arith.constant 0.000000e+00 : f32
    %42 = vector.broadcast %cst_25 : f32 to vector<8x128xf32>
    %43 = arith.cmpf ogt, %34, %42 : vector<8x128xf32>
    %44 = arith.select %43, %34, %41 : vector<8x128xi1>, vector<8x128xf32>
    %45 = arith.truncf %44 : vector<8x128xf32> to vector<8x128xbf16>
    %c0_26 = arith.constant 0 : index
    %c0_27 = arith.constant 0 : index
    %46 = vector.load %arg5[%c0_26, %c0_27] : memref<8x128xbf16, #tpu.memory_space<vmem>>, vector<8x128xbf16>
    tpu.vector_store %arg5[%c0_26, %c0_27], %45 {strides = array<i32>} : memref<8x128xbf16, #tpu.memory_space<vmem>>, vector<8x128xbf16>,
    %c2_i32 = arith.constant 2 : i32
    %c0_28 = arith.constant 0 : index
    %c0_29 = arith.constant 0 : index
    %47 = vector.load %arg5[%c0_28, %c0_29] : memref<8x128xbf16, #tpu.memory_space<vmem>>, vector<8x128xbf16>
    %c2 = arith.constant 2 : index
    %c0_30 = arith.constant 0 : index
    %c0_31 = arith.constant 0 : index
    %48 = vector.load %arg2[%c2, %c0_30, %c0_31] : memref<3x128x128xbf16, #tpu.memory_space<vmem>>, vector<1x128x128xbf16>
    %49 = vector.shape_cast %48 : vector<1x128x128xbf16> to vector<128x128xbf16>
    %cst_32 = arith.constant dense<0.000000e+00> : vector<8x128xf32>
    %50 = tpu.matmul %47, %49, %cst_32 {dimension_numbers = #tpu.dot_dimension_numbers<[1], [0], [0], [1], [0, 0, 1, 1], [], []>} : vector<8x128xbf16>, vector<128x128xbf16>, vector<8x128xf32> -> vector<8x128xf32>
    %c2_33 = arith.constant 2 : index
    %c0_34 = arith.constant 0 : index
    %c0_35 = arith.constant 0 : index
    %51 = vector.load %arg3[%c2_33, %c0_34, %c0_35] : memref<3x1x128xf32, #tpu.memory_space<vmem>>, vector<1x1x128xf32>
    %52 = vector.shape_cast %51 : vector<1x1x128xf32> to vector<1x128xf32>
    %53 = vector.broadcast %52 : vector<1x128xf32> to vector<8x128xf32>
    %54 = arith.addf %50, %53 : vector<8x128xf32>
    %c0_36 = arith.constant 0 : index
    %c0_37 = arith.constant 0 : index
    %55 = vector.load %arg4[%c0_36, %c0_37] : memref<8x128xf32, #tpu.memory_space<vmem>>, vector<8x128xf32>
    tpu.vector_store %arg4[%c0_36, %c0_37], %54 {strides = array<i32>} : memref<8x128xf32, #tpu.memory_space<vmem>>, vector<8x128xf32>,
    return
  }
  func.func @transform_0(%arg0: i32) -> (i32, i32) {
    %c0_i32 = arith.constant 0 : i32
    %c0_i32_0 = arith.constant 0 : i32
    return %arg0, %c0_i32 : i32, i32
  }
  func.func @transform_1(%arg0: i32) -> (i32, i32, i32) {
    %c0_i32 = arith.constant 0 : i32
    %c0_i32_0 = arith.constant 0 : i32
    %c0_i32_1 = arith.constant 0 : i32
    %c0_i32_2 = arith.constant 0 : i32
    return %c0_i32, %c0_i32_0, %c0_i32_1 : i32, i32, i32
  }
  func.func @transform_2(%arg0: i32) -> (i32, i32, i32) {
    %c0_i32 = arith.constant 0 : i32
    %c0_i32_0 = arith.constant 0 : i32
    %c0_i32_1 = arith.constant 0 : i32
    %c0_i32_2 = arith.constant 0 : i32
    return %c0_i32, %c0_i32_0, %c0_i32_1 : i32, i32, i32
  }
  func.func @transform_3(%arg0: i32) -> (i32, i32) {
    %c0_i32 = arith.constant 0 : i32
    %c0_i32_0 = arith.constant 0 : i32
    return %arg0, %c0_i32 : i32, i32
  }
}

</mosaic_0001>

<llo_original>
// kernel: dsnn_forward.1
$region0: #{dsnn_forward.1}
  #allocation0 [shape = 'u32[]', space=smem, size = 0x4, offset = 0x4, fixed_abs, tag = 'smem constant byte address 0x4 - core index']
  #allocation1 [shape = 'u32[144,128]{1,0:T(1,128)}', space=vmem, size = 0x12000, scoped, tag = 'internal scratch']
  #allocation2 [shape = 'bf16[8,128]{1,0:T(8,128)(2,1)}', space=vmem, size = 0x800, scoped, tag = 'scratch operand']
  %s0 = inlined_call_operand.vmem [shape: f32[8,128], index: 0, kind: input, shape index: {}]
  %s1 = inlined_call_operand.hbm [shape: bf16[3,128,128], index: 1, kind: input, shape index: {}]
  %s2 = inlined_call_operand.vmem [shape: f32[3,1,128], index: 2, kind: input, shape index: {}]
  %s3 = inlined_call_operand.hbm [shape: f32[8,128], index: 3, kind: output, shape index: {}]
  %s4 = sld [smem:[#allocation0]]
  $region26: #{dsnn_forward.1} parent=0
    _
  %s6 = ssub.s32 1, %s4
  %s7 = scalar_select 0, %s6, %s4
  $region1: #{dsnn_forward.1} parent=0
    #allocation3 [shape = 'u8[98304]{0}', space=vmem, size = 0x18000, scoped, tag = 'input window, operand 1, single buffered']
    #allocation4 [shape = 's32[1]{0}', space=sflag, size = 0x4, scoped, tag = 'scoped memory for dsnn_forward.1']
    #allocation5 [shape = 's32[1]{0}', space=sflag, size = 0x4, scoped, tag = 'scoped memory for dsnn_forward.1']
    #allocation6 [shape = 'u8[4096]{0}', space=vmem, size = 0x1000, scoped, tag = 'output window, operand 0, single buffered']
    %8 = vsyncpa [#allocation4], 0
    %9 = vsyncpa [#allocation5], 0
    // Predicated region
    $region2: #{dsnn_forward.1} parent=1 // pred_check
      _
    $region3: #{dsnn_forward.1} parent=1 // pred_check_branch
      %11 = sbr.rel (0) target = $region5
    $region4: #{dsnn_forward.1} parent=1 // pred_region
      _
    $region5: #{dsnn_forward.1} parent=1 // pred_fallthru
      _
    // Predicated region
    $region6: #{dsnn_forward.1} parent=1 // pred_check
      _
    $region7: #{dsnn_forward.1} parent=1 // pred_check_branch
      %13 = sbr.rel (0) target = $region9
    $region8: #{dsnn_forward.1} parent=1 // pred_region
      %s15 = ssub.s32 3072, 3072
      %16 = vsyncadd [#allocation4], %s15
      %s17 = sshll.u32 [#allocation3], 4
      %s18 = int_to_ptr.vmem [resolvable:$true] %s17
      %23 = dma.hbm_to_vmem [thread:$0]  %s1, 3072, %s18, [#allocation4], 64, 64, 4
    $region9: #{dsnn_forward.1} parent=1 // pred_fallthru
      _
    // Predicated region
    $region10: #{dsnn_forward.1} parent=1 // pred_check
      _
    $region11: #{dsnn_forward.1} parent=1 // pred_check_branch
      %25 = sbr.rel (0) target = $region13
    $region12: #{dsnn_forward.1} parent=1 // pred_region
      _
    $region13: #{dsnn_forward.1} parent=1 // pred_fallthru
      _
    // Predicated region
    $region14: #{dsnn_forward.1} parent=1 // pred_check
      _
    $region15: #{dsnn_forward.1} parent=1 // pred_check_branch
      %27 = sbr.rel (0) target = $region17
    $region16: #{dsnn_forward.1} parent=1 // pred_region
      %28 = dma.done [#allocation4], 3072
    $region17: #{dsnn_forward.1} parent=1 // pred_fallthru
      _
    %v30 = vld [vmem:[%s0] sm:$0xff]
    %v31 = vpack.c.bf16 %v30, %v30
    %32 = vst [vmem:[#allocation2] sm:$0xf] %v31
    %v33 = vld [vmem:[#allocation2] sm:$0xf]
    %v34 = vld [vmem:[#allocation3] sm:$0xf]
    %v35 = vld [vmem:[#allocation3 + $0x4] sm:$0xf]
    %v36 = vld [vmem:[#allocation3 + $0x8] sm:$0xf]
    %v37 = vld [vmem:[#allocation3 + $0xc] sm:$0xf]
    %v38 = vld [vmem:[#allocation3 + $0x10] sm:$0xf]
    %v39 = vld [vmem:[#allocation3 + $0x14] sm:$0xf]
    %v40 = vld [vmem:[#allocation3 + $0x18] sm:$0xf]
    %v41 = vld [vmem:[#allocation3 + $0x1c] sm:$0xf]
    %v42 = vld [vmem:[#allocation3 + $0x20] sm:$0xf]
    %v43 = vld [vmem:[#allocation3 + $0x24] sm:$0xf]
    %v44 = vld [vmem:[#allocation3 + $0x28] sm:$0xf]
    %v45 = vld [vmem:[#allocation3 + $0x2c] sm:$0xf]
    %v46 = vld [vmem:[#allocation3 + $0x30] sm:$0xf]
    %v47 = vld [vmem:[#allocation3 + $0x34] sm:$0xf]
    %v48 = vld [vmem:[#allocation3 + $0x38] sm:$0xf]
    %v49 = vld [vmem:[#allocation3 + $0x3c] sm:$0xf]
    %v50 = vld [vmem:[%s2] sm:$0x1]
    %v52 = vlaneseq
    %v53 = vshrl.u32 %v52, 7
    %v54 = vsub.s32 0, %v53
    %v55 = vrot.slane %v50, %v54
    %v73 = vunpack.c.l.b16 %v34
    %v74 = vunpack.c.l.b16 %v35
    %v75 = vunpack.c.l.b16 %v36
    %v76 = vunpack.c.l.b16 %v37
    %v77 = vunpack.c.l.b16 %v38
    %v78 = vunpack.c.l.b16 %v39
    %v79 = vunpack.c.l.b16 %v40
    %v80 = vunpack.c.l.b16 %v41
    %v81 = vunpack.c.l.b16 %v42
    %v82 = vunpack.c.l.b16 %v43
    %v83 = vunpack.c.l.b16 %v44
    %v84 = vunpack.c.l.b16 %v45
    %v85 = vunpack.c.l.b16 %v46
    %v86 = vunpack.c.l.b16 %v47
    %v87 = vunpack.c.l.b16 %v48
    %v88 = vunpack.c.l.b16 %v49
    %v89 = vpack.c.b16 %v74, %v73
    %v90 = vpack.c.b16 %v76, %v75
    %v91 = vpack.c.b16 %v78, %v77
    %v92 = vpack.c.b16 %v80, %v79
    %v93 = vpack.c.b16 %v82, %v81
    %v94 = vpack.c.b16 %v84, %v83
    %v95 = vpack.c.b16 %v86, %v85
    %v96 = vpack.c.b16 %v88, %v87
    %105 = vmatprep.subr.bf16.mxu0 0
    %106 = vmatpush1.bf16.msra.mxu0 %v96
    %107 = vmatprep.subr.bf16.mxu0 0
    %108 = vmatpush1.bf16.msra.mxu0 %v95
    %109 = vmatprep.subr.bf16.mxu0 0
    %110 = vmatpush1.bf16.msra.mxu0 %v94
    %111 = vmatprep.subr.bf16.mxu0 0
    %112 = vmatpush1.bf16.msra.mxu0 %v93
    %113 = vmatprep.subr.bf16.mxu0 0
    %114 = vmatpush1.bf16.msra.mxu0 %v92
    %115 = vmatprep.subr.bf16.mxu0 0
    %116 = vmatpush1.bf16.msra.mxu0 %v91
    %117 = vmatprep.subr.bf16.mxu0 0
    %118 = vmatpush1.bf16.msra.mxu0 %v90
    %119 = vmatprep.subr.bf16.mxu0 0
    %120 = vmatpush1.bf16.msra.mxu0 %v89
    %121 = vmatprep.subr.bf16.mxu0 0
    %122 = vmatpush2.bf16.msra.mxu0 0
    %123 = vmatprep.subr.bf16.mxu0 0
    %124 = vmatpush2.bf16.msra.mxu0 0
    %125 = vmatprep.subr.bf16.mxu0 0
    %126 = vmatpush2.bf16.msra.mxu0 0
    %127 = vmatprep.subr.bf16.mxu0 0
    %128 = vmatpush2.bf16.msra.mxu0 0
    %129 = vmatprep.subr.bf16.mxu0 0
    %130 = vmatpush2.bf16.msra.mxu0 0
    %131 = vmatprep.subr.bf16.mxu0 0
    %132 = vmatpush2.bf16.msra.mxu0 0
    %133 = vmatprep.subr.bf16.mxu0 0
    %134 = vmatpush2.bf16.msra.mxu0 0
    %135 = vmatprep.subr.bf16.mxu0 0
    %136 = vmatpush2.bf16.msra.mxu0 0
    %137 = vmatprep.mubr.bf16.mxu0 0
    %138 = vmatmul.mubr.bf16.gmra.mxu0 %v33
    %v139 = vpop.f32.mrf.mxu0
    %v140 = vadd.f32 %v55, %v139
    %v141 = vpop.f32.mrf.mxu0
    %v142 = vpop.f32.mrf.mxu0
    %v143 = vpop.f32.mrf.mxu0
    %144 = vdwg.mxu0
    %v145 = vmin.f32 %v140, 0.0
    %v146 = vmul.f32 %v145, 1.442695
    %v147 = vpow.pop %v146
    %v148 = vsub.f32 %v147, 1.0
    %v149 = vmul.f32 %v148, 1.6732632
    %vm150 = vcmp.gt.f32.partialorder %v140, 0.0
    %v151 = vsel %vm150, %v140, %v149
    %v152 = vpack.c.bf16 %v151, %v151
    %153 = vst [vmem:[#allocation2] sm:$0xf] %v152
    %v154 = vld [vmem:[#allocation2] sm:$0xf]
    %s155 = scalar_lea.vmem [#allocation3], 64
    %v156 = vld [vmem:[%s155] sm:$0xf]
    %v157 = vld [vmem:[%s155 + $0x4] sm:$0xf]
    %v158 = vld [vmem:[%s155 + $0x8] sm:$0xf]
    %v159 = vld [vmem:[%s155 + $0xc] sm:$0xf]
    %v160 = vld [vmem:[%s155 + $0x10] sm:$0xf]
    %v161 = vld [vmem:[%s155 + $0x14] sm:$0xf]
    %v162 = vld [vmem:[%s155 + $0x18] sm:$0xf]
    %v163 = vld [vmem:[%s155 + $0x1c] sm:$0xf]
    %v164 = vld [vmem:[%s155 + $0x20] sm:$0xf]
    %v165 = vld [vmem:[%s155 + $0x24] sm:$0xf]
    %v166 = vld [vmem:[%s155 + $0x28] sm:$0xf]
    %v167 = vld [vmem:[%s155 + $0x2c] sm:$0xf]
    %v168 = vld [vmem:[%s155 + $0x30] sm:$0xf]
    %v169 = vld [vmem:[%s155 + $0x34] sm:$0xf]
    %v170 = vld [vmem:[%s155 + $0x38] sm:$0xf]
    %v171 = vld [vmem:[%s155 + $0x3c] sm:$0xf]
    %s172 = scalar_lea.vmem %s2, 1
    %v173 = vld [vmem:[%s172] sm:$0x1]
    %v175 = vlaneseq
    %v176 = vshrl.u32 %v175, 7
    %v177 = vsub.s32 0, %v176
    %v178 = vrot.slane %v173, %v177
    %v196 = vunpack.c.l.b16 %v156
    %v197 = vunpack.c.l.b16 %v157
    %v198 = vunpack.c.l.b16 %v158
    %v199 = vunpack.c.l.b16 %v159
    %v200 = vunpack.c.l.b16 %v160
    %v201 = vunpack.c.l.b16 %v161
    %v202 = vunpack.c.l.b16 %v162
    %v203 = vunpack.c.l.b16 %v163
    %v204 = vunpack.c.l.b16 %v164
    %v205 = vunpack.c.l.b16 %v165
    %v206 = vunpack.c.l.b16 %v166
    %v207 = vunpack.c.l.b16 %v167
    %v208 = vunpack.c.l.b16 %v168
    %v209 = vunpack.c.l.b16 %v169
    %v210 = vunpack.c.l.b16 %v170
    %v211 = vunpack.c.l.b16 %v171
    %v212 = vpack.c.b16 %v197, %v196
    %v213 = vpack.c.b16 %v199, %v198
    %v214 = vpack.c.b16 %v201, %v200
    %v215 = vpack.c.b16 %v203, %v202
    %v216 = vpack.c.b16 %v205, %v204
    %v217 = vpack.c.b16 %v207, %v206
    %v218 = vpack.c.b16 %v209, %v208
    %v219 = vpack.c.b16 %v211, %v210
    %228 = vmatprep.subr.bf16.mxu0 0
    %229 = vmatpush1.bf16.msra.mxu0 %v219
    %230 = vmatprep.subr.bf16.mxu0 0
    %231 = vmatpush1.bf16.msra.mxu0 %v218
    %232 = vmatprep.subr.bf16.mxu0 0
    %233 = vmatpush1.bf16.msra.mxu0 %v217
    %234 = vmatprep.subr.bf16.mxu0 0
    %235 = vmatpush1.bf16.msra.mxu0 %v216
    %236 = vmatprep.subr.bf16.mxu0 0
    %237 = vmatpush1.bf16.msra.mxu0 %v215
    %238 = vmatprep.subr.bf16.mxu0 0
    %239 = vmatpush1.bf16.msra.mxu0 %v214
    %240 = vmatprep.subr.bf16.mxu0 0
    %241 = vmatpush1.bf16.msra.mxu0 %v213
    %242 = vmatprep.subr.bf16.mxu0 0
    %243 = vmatpush1.bf16.msra.mxu0 %v212
    %244 = vmatprep.subr.bf16.mxu0 0
    %245 = vmatpush2.bf16.msra.mxu0 0
    %246 = vmatprep.subr.bf16.mxu0 0
    %247 = vmatpush2.bf16.msra.mxu0 0
    %248 = vmatprep.subr.bf16.mxu0 0
    %249 = vmatpush2.bf16.msra.mxu0 0
    %250 = vmatprep.subr.bf16.mxu0 0
    %251 = vmatpush2.bf16.msra.mxu0 0
    %252 = vmatprep.subr.bf16.mxu0 0
    %253 = vmatpush2.bf16.msra.mxu0 0
    %254 = vmatprep.subr.bf16.mxu0 0
    %255 = vmatpush2.bf16.msra.mxu0 0
    %256 = vmatprep.subr.bf16.mxu0 0
    %257 = vmatpush2.bf16.msra.mxu0 0
    %258 = vmatprep.subr.bf16.mxu0 0
    %259 = vmatpush2.bf16.msra.mxu0 0
    %260 = vmatprep.mubr.bf16.mxu0 0
    %261 = vmatmul.mubr.bf16.gmra.mxu0 %v154
    %v262 = vpop.f32.mrf.mxu0
    %v263 = vadd.f32 %v178, %v262
    %v264 = vpop.f32.mrf.mxu0
    %v265 = vpop.f32.mrf.mxu0
    %v266 = vpop.f32.mrf.mxu0
    %267 = vdwg.mxu0
    %v268 = vmin.f32 %v263, 0.0
    %v269 = vmul.f32 %v268, 1.442695
    %v270 = vpow.pop %v269
    %v271 = vsub.f32 %v270, 1.0
    %v272 = vmul.f32 %v271, 1.6732632
    %vm273 = vcmp.gt.f32.partialorder %v263, 0.0
    %v274 = vsel %vm273, %v263, %v272
    %v275 = vpack.c.bf16 %v274, %v274
    %276 = vst [vmem:[#allocation2] sm:$0xf] %v275
    %v277 = vld [vmem:[#allocation2] sm:$0xf]
    %s278 = scalar_lea.vmem [#allocation3], 128
    %v279 = vld [vmem:[%s278] sm:$0xf]
    %v280 = vld [vmem:[%s278 + $0x4] sm:$0xf]
    %v281 = vld [vmem:[%s278 + $0x8] sm:$0xf]
    %v282 = vld [vmem:[%s278 + $0xc] sm:$0xf]
    %v283 = vld [vmem:[%s278 + $0x10] sm:$0xf]
    %v284 = vld [vmem:[%s278 + $0x14] sm:$0xf]
    %v285 = vld [vmem:[%s278 + $0x18] sm:$0xf]
    %v286 = vld [vmem:[%s278 + $0x1c] sm:$0xf]
    %v287 = vld [vmem:[%s278 + $0x20] sm:$0xf]
    %v288 = vld [vmem:[%s278 + $0x24] sm:$0xf]
    %v289 = vld [vmem:[%s278 + $0x28] sm:$0xf]
    %v290 = vld [vmem:[%s278 + $0x2c] sm:$0xf]
    %v291 = vld [vmem:[%s278 + $0x30] sm:$0xf]
    %v292 = vld [vmem:[%s278 + $0x34] sm:$0xf]
    %v293 = vld [vmem:[%s278 + $0x38] sm:$0xf]
    %v294 = vld [vmem:[%s278 + $0x3c] sm:$0xf]
    %s295 = scalar_lea.vmem %s2, 2
    %v296 = vld [vmem:[%s295] sm:$0x1]
    %v298 = vlaneseq
    %v299 = vshrl.u32 %v298, 7
    %v300 = vsub.s32 0, %v299
    %v301 = vrot.slane %v296, %v300
    %v319 = vunpack.c.l.b16 %v279
    %v320 = vunpack.c.l.b16 %v280
    %v321 = vunpack.c.l.b16 %v281
    %v322 = vunpack.c.l.b16 %v282
    %v323 = vunpack.c.l.b16 %v283
    %v324 = vunpack.c.l.b16 %v284
    %v325 = vunpack.c.l.b16 %v285
    %v326 = vunpack.c.l.b16 %v286
    %v327 = vunpack.c.l.b16 %v287
    %v328 = vunpack.c.l.b16 %v288
    %v329 = vunpack.c.l.b16 %v289
    %v330 = vunpack.c.l.b16 %v290
    %v331 = vunpack.c.l.b16 %v291
    %v332 = vunpack.c.l.b16 %v292
    %v333 = vunpack.c.l.b16 %v293
    %v334 = vunpack.c.l.b16 %v294
    %v335 = vpack.c.b16 %v320, %v319
    %v336 = vpack.c.b16 %v322, %v321
    %v337 = vpack.c.b16 %v324, %v323
    %v338 = vpack.c.b16 %v326, %v325
    %v339 = vpack.c.b16 %v328, %v327
    %v340 = vpack.c.b16 %v330, %v329
    %v341 = vpack.c.b16 %v332, %v331
    %v342 = vpack.c.b16 %v334, %v333
    %351 = vmatprep.subr.bf16.mxu0 0
    %352 = vmatpush1.bf16.msra.mxu0 %v342
    %353 = vmatprep.subr.bf16.mxu0 0
    %354 = vmatpush1.bf16.msra.mxu0 %v341
    %355 = vmatprep.subr.bf16.mxu0 0
    %356 = vmatpush1.bf16.msra.mxu0 %v340
    %357 = vmatprep.subr.bf16.mxu0 0
    %358 = vmatpush1.bf16.msra.mxu0 %v339
    %359 = vmatprep.subr.bf16.mxu0 0
    %360 = vmatpush1.bf16.msra.mxu0 %v338
    %361 = vmatprep.subr.bf16.mxu0 0
    %362 = vmatpush1.bf16.msra.mxu0 %v337
    %363 = vmatprep.subr.bf16.mxu0 0
    %364 = vmatpush1.bf16.msra.mxu0 %v336
    %365 = vmatprep.subr.bf16.mxu0 0
    %366 = vmatpush1.bf16.msra.mxu0 %v335
    %367 = vmatprep.subr.bf16.mxu0 0
    %368 = vmatpush2.bf16.msra.mxu0 0
    %369 = vmatprep.subr.bf16.mxu0 0
    %370 = vmatpush2.bf16.msra.mxu0 0
    %371 = vmatprep.subr.bf16.mxu0 0
    %372 = vmatpush2.bf16.msra.mxu0 0
    %373 = vmatprep.subr.bf16.mxu0 0
    %374 = vmatpush2.bf16.msra.mxu0 0
    %375 = vmatprep.subr.bf16.mxu0 0
    %376 = vmatpush2.bf16.msra.mxu0 0
    %377 = vmatprep.subr.bf16.mxu0 0
    %378 = vmatpush2.bf16.msra.mxu0 0
    %379 = vmatprep.subr.bf16.mxu0 0
    %380 = vmatpush2.bf16.msra.mxu0 0
    %381 = vmatprep.subr.bf16.mxu0 0
    %382 = vmatpush2.bf16.msra.mxu0 0
    %383 = vmatprep.mubr.bf16.mxu0 0
    %384 = vmatmul.mubr.bf16.gmra.mxu0 %v277
    %v385 = vpop.f32.mrf.mxu0
    %v386 = vadd.f32 %v301, %v385
    %v387 = vpop.f32.mrf.mxu0
    %v388 = vpop.f32.mrf.mxu0
    %v389 = vpop.f32.mrf.mxu0
    %390 = vdwg.mxu0
    %391 = vst [vmem:[#allocation6] sm:$0xff] %v386
    // Predicated region
    $region18: #{dsnn_forward.1} parent=1 // pred_check
      _
    $region19: #{dsnn_forward.1} parent=1 // pred_check_branch
      %393 = sbr.rel (0) target = $region21
    $region20: #{dsnn_forward.1} parent=1 // pred_region
      %s395 = ssub.s32 128, 128
      %396 = vsyncadd [#allocation5], %s395
      %s398 = sshll.u32 [#allocation6], 4
      %s399 = int_to_ptr.vmem [resolvable:$true] %s398
      %401 = dma.vmem_to_hbm [thread:$0]  %s399, 128, %s3, [#allocation5]
    $region21: #{dsnn_forward.1} parent=1 // pred_fallthru
      _
    // Predicated region
    $region22: #{dsnn_forward.1} parent=1 // pred_check
      _
    $region23: #{dsnn_forward.1} parent=1 // pred_check_branch
      %403 = sbr.rel (0) target = $region25
    $region24: #{dsnn_forward.1} parent=1 // pred_region
      %404 = dma.done [#allocation5], 128
    $region25: #{dsnn_forward.1} parent=1 // pred_fallthru
      _
    %405 = vsyncpa [#allocation4], 1
    %406 = vsyncpa [#allocation5], 1

</llo_original>
